<compile_context>
chip_gen: v7x
topology: tpu7x:2x2x1
jax: 0.10.0
libtpu: 0.0.40
codegen_flags: <defaults>
</compile_context>

<pallas_src>
import functools
import math

import jax
import jax.numpy as jnp
from jax.experimental import pallas as pl
from jax.experimental.pallas import tpu as pltpu

_LANE = 128                 # lane-dense last dim (one full vreg lane row)
_BLOCK_BYTES = 4 << 20      # ~4 MiB per block: good on v5e/v6e, inside v7x's 4-8 MiB
_VMEM_LIMIT = 48 << 20      # headroom for double-buffered in+out blocks on all gens
_MIN_PALLAS_ELEMENTS = 1 << 18  # below this, plain fused jnp beats a pallas_call


def _softplus_bijector_kernel(x_ref, o_ref, *, scale, min_input, max_input,
                              needs_threshold):
    # Load tile, compute in f32 regardless of storage dtype.
    x = x_ref[...].astype(jnp.float32)
    z = jnp.clip(x, min_input, max_input)
    if scale != 1.0:
        z = z * scale
    if needs_threshold:
        # torch.nn.functional.softplus linear branch (beta=1, threshold=20).
        sp = jnp.where(z > 20.0, z, jnp.log1p(jnp.exp(jnp.minimum(z, 20.0))))
    else:
        # Clamp guarantees z <= max_input*scale <= 20: branch is dead code.
        sp = jnp.log1p(jnp.exp(z))
    if scale != 1.0:
        sp = sp / scale
    o_ref[...] = sp.astype(o_ref.dtype)


def _softplus_jnp(x, *, scale, min_input, max_input):
    """Fused-XLA fallback for tiny inputs and the <128-element tail."""
    xf = x.astype(jnp.float32)
    z = jnp.clip(xf, min_input, max_input) * scale
    sp = jnp.where(z > 20.0, z, jnp.log1p(jnp.exp(jnp.minimum(z, 20.0)))) / scale
    return sp.astype(x.dtype)


def _pallas_bulk(x2d, *, scale, min_input, max_input, needs_threshold):
    """Run the kernel on a lane-dense (rows, 128) slab."""
    rows = x2d.shape[0]
    dtype = x2d.dtype
    itemsize = jnp.dtype(dtype).itemsize
    pack = 8 * max(1, 4 // itemsize)        # sublane packing: 8 f32, 16 bf16, 32 i8/fp8

    block_rows = max(pack, (_BLOCK_BYTES // (_LANE * itemsize)) // pack * pack)
    if rows > pack:
        # At least 2 grid blocks so both v7x TensorCores get work (no-op on v5e/v6e).
        half = -(-rows // 2)
        half = -(-half // pack) * pack
        block_rows = min(block_rows, half)
    if block_rows >= rows:
        block_rows = rows                    # single full-extent block (small forced path)
    num_blocks = pl.cdiv(rows, block_rows)

    kernel = functools.partial(
        _softplus_bijector_kernel,
        scale=scale, min_input=min_input, max_input=max_input,
        needs_threshold=needs_threshold)

    return pl.pallas_call(
        kernel,
        out_shape=jax.ShapeDtypeStruct((rows, _LANE), dtype),
        grid=(num_blocks,),
        in_specs=[pl.BlockSpec((block_rows, _LANE), lambda i: (i, 0))],
        out_specs=pl.BlockSpec((block_rows, _LANE), lambda i: (i, 0)),
        compiler_params=pltpu.CompilerParams(
            dimension_semantics=("parallel",),
            vmem_limit_bytes=_VMEM_LIMIT,
        ),
    )(x2d)


def _forward_impl(x, *, scale, min_input, max_input, min_pallas_elements):
    """Traced under jax.jit; all shape-dependent branching is trace-time Python."""
    needs_threshold = (max_input * scale) > 20.0
    total = math.prod(x.shape)
    if total == 0:
        return x
    if total < max(min_pallas_elements, _LANE):
        # Tiny tensors: XLA elementwise fusion is already at HBM roofline;
        # skip the pallas_call fixed cost entirely.
        return _softplus_jnp(x, scale=scale, min_input=min_input, max_input=max_input)

    flat = x.reshape(-1)                     # free reshape (contiguous default layout)
    bulk = (total // _LANE) * _LANE
    rows = bulk // _LANE

    if bulk == total:
        out2d = _pallas_bulk(flat.reshape(rows, _LANE), scale=scale,
                             min_input=min_input, max_input=max_input,
                             needs_threshold=needs_threshold)
        return out2d.reshape(x.shape)

    # Non-multiple-of-128 length: kernel on the aligned prefix, <128-element
    # tail via jnp in the wrapper (no full-array pad/slice round trip).
    out_bulk = _pallas_bulk(flat[:bulk].reshape(rows, _LANE), scale=scale,
                            min_input=min_input, max_input=max_input,
                            needs_threshold=needs_threshold).reshape(-1)
    out_tail = _softplus_jnp(flat[bulk:], scale=scale,
                             min_input=min_input, max_input=max_input)
    return jnp.concatenate([out_bulk, out_tail]).reshape(x.shape)


class SoftplusBijector:
    def __init__(self, scale: float = 1.0, min_value: float = 0.01,
                 max_value: float = 1.0,
                 min_pallas_elements: int = _MIN_PALLAS_ELEMENTS):
        self.scale = float(scale)
        self.min_value, self.max_value = float(min_value), float(max_value)
        # inverse() on python floats, same as the PyTorch __init__ path.
        self.min_input = self._inverse_scalar(min_value)
        self.max_input = self._inverse_scalar(max_value)
        if not (math.isfinite(self.min_input) and math.isfinite(self.max_input)):
            raise ValueError(
                "SoftplusBijector: expm1(value*scale) overflowed at init; "
                "reduce scale*max_value below ~700.")
        # Whole forward path jitted once; re-traces per shape/dtype.
        self._forward = jax.jit(functools.partial(
            _forward_impl,
            scale=self.scale,
            min_input=self.min_input,
            max_input=self.max_input,
            min_pallas_elements=int(min_pallas_elements)))
        # TODO(synk): optionally pass input_output_aliases={0: 0} through
        # pallas_call when the caller donates x (halves HBM footprint only).

    def _inverse_scalar(self, v: float) -> float:
        clamped = max(self.min_value, min(v, self.max_value))
        return math.log(math.expm1(clamped * self.scale)) / self.scale

    def forward(self, x: jax.Array) -> jax.Array:
        return self._forward(x)

    __call__ = forward

    def __repr__(self):
        return (f"SoftplusBijector(scale={self.scale}, min={self.min_value}, "
                f"max={self.max_value})")


def _reference_forward(bij: SoftplusBijector, x: jax.Array) -> jax.Array:
    clamped = jnp.clip(x.astype(jnp.float32), bij.min_input, bij.max_input)
    return (jax.nn.softplus(clamped * bij.scale) / bij.scale).astype(x.dtype)


if __name__ == "__main__":
    key = jax.random.PRNGKey(0)
    # NCHW input, small shape (matches the module's typical tensor use).
    x = jax.random.normal(key, (2, 4, 16, 16), dtype=jnp.float32)

    # min_pallas_elements=0 forces the Pallas path even at this small size so
    # the kernel itself is exercised (2048 elems -> 16 rows -> 2 grid blocks).
    bij = SoftplusBijector(scale=1.0, min_value=0.01, max_value=1.0,
                           min_pallas_elements=0)
    out = jax.block_until_ready(bij(x))
    ref = _reference_forward(bij, x)
    assert out.shape == x.shape and out.dtype == x.dtype
    assert jnp.allclose(out, ref, atol=1e-5, rtol=1e-5), "mismatch vs reference"

    # Non-multiple-of-128 length -> aligned-prefix kernel + jnp tail path.
    x_big = jax.random.normal(jax.random.PRNGKey(1), (3, 7, 333), dtype=jnp.float32)
    out_big = jax.block_until_ready(bij(x_big))
    ref_big = _reference_forward(bij, x_big)
    assert jnp.allclose(out_big, ref_big, atol=1e-5, rtol=1e-5), "mismatch (tail path)"

    # Default dispatch: tiny tensors bypass Pallas and use the fused jnp path.
    bij_default = SoftplusBijector()
    out_small = jax.block_until_ready(bij_default(x))
    assert jnp.allclose(out_small, ref, atol=1e-5, rtol=1e-5), "mismatch (jnp path)"

    print("KERNEL_OK")
</pallas_src>

<mosaic_0001>
module attributes {stable_mosaic.version = 11 : i64} {
  func.func @_softplus_bijector_kernel(%arg0: i32, %arg1: memref<8x128xf32, #tpu.memory_space<vmem>>, %arg2: memref<8x128xf32, #tpu.memory_space<vmem>>) attributes {dimension_semantics = [#tpu.dimension_semantics<parallel>], iteration_bounds = array<i64: 2>, scalar_prefetch = 0 : i64, scratch_operands = 0 : i64, tpu.core_type = #tpu.core_type<tc>, window_params = [{transform_indices = @transform_0, window_bounds = array<i64: 8, 128>}, {transform_indices = @transform_1, window_bounds = array<i64: 8, 128>}]} {
    %c0 = arith.constant 0 : index
    %c0_0 = arith.constant 0 : index
    %0 = vector.load %arg1[%c0, %c0_0] : memref<8x128xf32, #tpu.memory_space<vmem>>, vector<8x128xf32>
    %cst = arith.constant -4.60016584 : f32
    %cst_1 = arith.constant 0.541324854 : f32
    %1 = vector.broadcast %cst : f32 to vector<8x128xf32>
    %2 = arith.maximumf %1, %0 : vector<8x128xf32>
    %3 = vector.broadcast %cst_1 : f32 to vector<8x128xf32>
    %4 = arith.minimumf %3, %2 : vector<8x128xf32>
    %5 = math.exp %4 : vector<8x128xf32>
    %6 = math.log1p %5 : vector<8x128xf32>
    %c0_2 = arith.constant 0 : index
    %c0_3 = arith.constant 0 : index
    %7 = vector.load %arg2[%c0_2, %c0_3] : memref<8x128xf32, #tpu.memory_space<vmem>>, vector<8x128xf32>
    tpu.vector_store %arg2[%c0_2, %c0_3], %6 {strides = array<i32>} : memref<8x128xf32, #tpu.memory_space<vmem>>, vector<8x128xf32>,
    return
  }
  func.func @transform_0(%arg0: i32) -> (i32, i32) {
    %c0_i32 = arith.constant 0 : i32
    %c0_i32_0 = arith.constant 0 : i32
    return %arg0, %c0_i32 : i32, i32
  }
  func.func @transform_1(%arg0: i32) -> (i32, i32) {
    %c0_i32 = arith.constant 0 : i32
    %c0_i32_0 = arith.constant 0 : i32
    return %arg0, %c0_i32 : i32, i32
  }
}

</mosaic_0001>

<llo_original>
// kernel: _forward_impl.1
$region0: #{_forward_impl.1}
  #allocation0 [shape = 'u32[]', space=smem, size = 0x4, offset = 0x4, fixed_abs, tag = 'smem constant byte address 0x4 - core index']
  #allocation1 [shape = 'u32[144,128]{1,0:T(1,128)}', space=vmem, size = 0x12000, scoped, tag = 'internal scratch']
  %s0 = inlined_call_operand.vmem [shape: f32[16,128], index: 0, kind: input, shape index: {}]
  %s1 = inlined_call_operand.vmem [shape: f32[16,128], index: 1, kind: output, shape index: {}]
  %s2 = sld [smem:[#allocation0]]
  $region37: #{_forward_impl.1} parent=0
    _
  %s4 = ssub.s32 1, %s2
  %s5 = scalar_select 0, %s4, %s2
  loop: start=0, step=1, limit=4
  $region2: #{_forward_impl.1} parent=0 // loop_pre_header
    _
  $region3: #{_forward_impl.1} parent=0 // loop_header
    %s7 = sphi 0, %s11
    %p8 = scmp.ge.s32.totalorder %s7, 4
    %s17 = sphi 0, %s19
    %s20 = sphi 0, %s17
    %s21 = sphi 0, %s20
    %s37 = sphi 0, %s21
    %s43 = sphi 0, %s45
    %s46 = sphi 0, %s43
    %s47 = sphi 0, %s46
    %s63 = sphi 0, %s47
  $region4: #{_forward_impl.1} parent=0 // loop_header_branch
    %10 = sbr.rel (%p8) target = $region8
  $region5: #{_forward_impl.1} parent=0 // loop_body
    %s12 = ssub.s32 %s7, 1
    %s13 = ssub.s32 %s7, 2
    %s14 = sadd.s32 %s7, 1
    %s15 = ssub.s32 %s7, %s14
    %p16 = scmp.eq.s32.totalorder %s15, 0
    %s18 = sadd.s32 %s17, 1
    %s19 = scalar_select %p16, %s17, %s18
    %p22 = pneg %p16
    %p23 = scmp.eq.s32.totalorder %s7, 1
    %p24 = por %p22, %p23
    %p25 = scmp.ne.s32.totalorder %s17, %s20
    %p26 = scmp.eq.s32.totalorder %s7, 0
    %p27 = por %p25, %p26
    %p28 = scmp.ne.s32.totalorder %s17, %s20
    %p29 = scmp.eq.s32.totalorder %s12, 1
    %p30 = por %p28, %p29
    %p31 = scmp.ne.s32.totalorder %s20, %s21
    %p32 = scmp.eq.s32.totalorder %s12, 0
    %p33 = por %p31, %p32
    %p34 = scmp.ne.s32.totalorder %s20, %s21
    %p35 = scmp.eq.s32.totalorder %s13, 1
    %p36 = por %p34, %p35
    %p38 = scmp.ne.s32.totalorder %s21, %s37
    %p39 = scmp.eq.s32.totalorder %s13, 0
    %p40 = por %p38, %p39
    %s41 = ssub.s32 %s7, %s14
    %p42 = scmp.eq.s32.totalorder %s41, 0
    %s44 = sadd.s32 %s43, 1
    %s45 = scalar_select %p42, %s43, %s44
    %p48 = pneg %p42
    %p49 = scmp.eq.s32.totalorder %s7, 1
    %p50 = por %p48, %p49
    %p51 = scmp.ne.s32.totalorder %s43, %s46
    %p52 = scmp.eq.s32.totalorder %s7, 0
    %p53 = por %p51, %p52
    %p54 = scmp.ne.s32.totalorder %s43, %s46
    %p55 = scmp.eq.s32.totalorder %s12, 1
    %p56 = por %p54, %p55
    %p57 = scmp.ne.s32.totalorder %s46, %s47
    %p58 = scmp.eq.s32.totalorder %s12, 0
    %p59 = por %p57, %p58
    %p60 = scmp.ne.s32.totalorder %s46, %s47
    %p61 = scmp.eq.s32.totalorder %s13, 1
    %p62 = por %p60, %p61
    %p64 = scmp.ne.s32.totalorder %s47, %s63
    %p65 = scmp.eq.s32.totalorder %s13, 0
    %p66 = por %p64, %p65
    %p67 = scmp.le.s32.totalorder 1, %s7
    %p68 = scmp.lt.s32.totalorder %s7, 3
    %p69 = pnand %p67, %p68
    %p70 = pneg %p69
    // Predicated region
    $region9: #{_forward_impl.1} parent=5 // pred_check
      _
    $region10: #{_forward_impl.1} parent=5 // pred_check_branch
      %72 = sbr.rel (%p69) target = $region12
    $region11: #{_forward_impl.1} parent=5 // pred_region
      %s73 = ssub.s32 %s7, 1
    $region12: #{_forward_impl.1} parent=5 // pred_fallthru
      _
    %p74 = scmp.lt.s32.totalorder %s7, 2
    // Predicated region
    $region13: #{_forward_impl.1} parent=5 // pred_check
      %p75 = pneg %p74
    $region14: #{_forward_impl.1} parent=5 // pred_check_branch
      %77 = sbr.rel (%p75) target = $region16
    $region15: #{_forward_impl.1} parent=5 // pred_region
      // Predicated region
      $region17: #{_forward_impl.1} parent=15 // pred_check
        %p78 = pneg %p27
      $region18: #{_forward_impl.1} parent=15 // pred_check_branch
        %80 = sbr.rel (%p78) target = $region20
      $region19: #{_forward_impl.1} parent=15 // pred_region
        %p81 = scmp.lt.s32.totalorder %s7, 1
        %s82 = scalar_select %p81, %s7, 1
        %s83 = smul.addr %s82, 8
        %s84 = scalar_lea.vmem %s0, %s83
      $region20: #{_forward_impl.1} parent=15 // pred_fallthru
        _
    $region16: #{_forward_impl.1} parent=5 // pred_fallthru
      _
    %p85 = scmp.le.s32.totalorder 1, %s7
    %p86 = scmp.lt.s32.totalorder %s7, 3
    %p87 = pnand %p85, %p86
    %p88 = pneg %p87
    // Predicated region
    $region21: #{_forward_impl.1} parent=5 // pred_check
      _
    $region22: #{_forward_impl.1} parent=5 // pred_check_branch
      %90 = sbr.rel (%p87) target = $region24
    $region23: #{_forward_impl.1} parent=5 // pred_region
      %s91 = ssub.s32 %s7, 1
      %p92 = scmp.lt.s32.totalorder %s12, 1
      %s93 = scalar_select %p92, %s12, 1
      %s94 = smul.addr %s93, 8
      %s95 = scalar_lea.vmem %s0, %s94
      %p96 = pneg %p33
      %p97 = pneg %p30
      %p98 = pneg %p59
      %p99 = pneg %p56
      %p100 = scmp.lt.s32.totalorder %s12, 1
      %s101 = scalar_select %p100, %s12, 1
      %s102 = smul.addr %s101, 8
      %s103 = scalar_lea.vmem %s1, %s102
      %p104 = scmp.lt.s32.totalorder %s12, 1
      %s105 = scalar_select %p104, %s12, 1
      %s106 = smul.addr %s105, 8
      %s107 = scalar_lea.vmem %s0, %s106
      %p108 = scmp.lt.s32.totalorder %s12, 1
      %s109 = scalar_select %p108, %s12, 1
      %s110 = smul.addr %s109, 8
      %s111 = scalar_lea.vmem %s1, %s110
      %v112 = vld [vmem:[%s107] sm:$0xff]
      %v113 = vmax.f32 %v112, -4.600166
      %v114 = vmin.f32 %v113, 0.54132485
      %v115 = vmul.f32 %v114, 1.442695
      %v116 = vpow.pop %v115
      %v117 = vadd.f32 %v116, 1.0
      %v118 = vlog2.pop %v117
      %v119 = vmul.f32 %v118, 0.6931472
      %v120 = vmul.f32 -0.5, %v116
      %v121 = vadd.f32 %v120, 1.0
      %v122 = vmul.f32 %v121, %v116
      %v123 = vand.u32 2147483647, %v116
      %vm124 = vcmp.lt.f32.partialorder %v123, 0.0004427343
      %v125 = vsel %vm124, %v122, %v119
      %126 = vst [vmem:[%s111] sm:$0xff] %v125
      %p127 = scmp.lt.s32.totalorder %s12, 1
      %s128 = scalar_select %p127, %s12, 1
      %s129 = smul.addr %s128, 8
      %s130 = scalar_lea.vmem %s1, %s129
      // Predicated region
      $region25: #{_forward_impl.1} parent=23 // pred_check
        %p131 = pneg %p56
      $region26: #{_forward_impl.1} parent=23 // pred_check_branch
        %133 = sbr.rel (%p131) target = $region28
      $region27: #{_forward_impl.1} parent=23 // pred_region
        _
      $region28: #{_forward_impl.1} parent=23 // pred_fallthru
        _
    $region24: #{_forward_impl.1} parent=5 // pred_fallthru
      _
    %p134 = scmp.le.s32.totalorder 2, %s7
    // Predicated region
    $region29: #{_forward_impl.1} parent=5 // pred_check
      %p135 = pneg %p134
    $region30: #{_forward_impl.1} parent=5 // pred_check_branch
      %137 = sbr.rel (%p135) target = $region32
    $region31: #{_forward_impl.1} parent=5 // pred_region
      %s138 = ssub.s32 %s7, 2
      // Predicated region
      $region33: #{_forward_impl.1} parent=31 // pred_check
        %p139 = pneg %p62
      $region34: #{_forward_impl.1} parent=31 // pred_check_branch
        %141 = sbr.rel (%p139) target = $region36
      $region35: #{_forward_impl.1} parent=31 // pred_region
        %p142 = scmp.lt.s32.totalorder %s13, 1
        %s143 = scalar_select %p142, %s13, 1
        %s144 = smul.addr %s143, 8
        %s145 = scalar_lea.vmem %s1, %s144
      $region36: #{_forward_impl.1} parent=31 // pred_fallthru
        _
    $region32: #{_forward_impl.1} parent=5 // pred_fallthru
      _
  $region6: #{_forward_impl.1} parent=0 // loop_footer
    %s11 = sadd.s32 1, %s7
  $region7: #{_forward_impl.1} parent=0 // loop_footer_branch
    %6 = sbr.rel target = $region3
  $region8: #{_forward_impl.1} parent=0 // loop_exit
    _

</llo_original>
